<compile_context>
chip_gen: v7x
topology: tpu7x:2x2x1
jax: 0.10.0
libtpu: 0.0.40
codegen_flags: <defaults>
</compile_context>

<pallas_src>
import jax
import jax.numpy as jnp
from jax.experimental import pallas as pl
from jax.experimental.pallas import tpu as pltpu


def _round_up(x: int, m: int) -> int:
    return (x + m - 1) // m * m


def _ranking_mlp_kernel(q_ref, d_ref, w1q_ref, w1d_ref, b1_ref, w2_ref, b2_ref, o_ref):
    """One batch tile of: relu(cat(q, d) @ W1 + b1) @ w2 + b2.

    q_ref:   (TB, Dq)     f32   streamed per grid step
    d_ref:   (TB, Dd)     f32   streamed per grid step
    w1q_ref: (Dq, H)      f32   VMEM-resident
    w1d_ref: (Dd, H)      f32   VMEM-resident
    b1_ref:  (1, H)       f32   VMEM-resident
    w2_ref:  (1, H)       f32   VMEM-resident (fc2 weight as a lane row vector)
    b2_ref:  (1,)         f32   SMEM scalar
    o_ref:   (1, 1, TB)   f32   lane-dense scores for this tile
    """
    # fc1 with the concat fused away:  cat(q, d) @ W1 == q @ W1[:Dq] + d @ W1[Dq:]
    h = jnp.dot(q_ref[...], w1q_ref[...], preferred_element_type=jnp.float32)
    h = h + jnp.dot(d_ref[...], w1d_ref[...], preferred_element_type=jnp.float32)
    h = jnp.maximum(h + b1_ref[...], 0.0)  # (TB, H) f32, bias + ReLU on the VPU

    # fc2 has a single output column: contract over H with w2 as the (1, H)
    # LHS so the result lands lane-major as (1, TB) — unmasked, lane-dense
    # stores instead of TB/8 masked single-lane writes.
    score = jax.lax.dot_general(
        w2_ref[...], h,
        dimension_numbers=(((1,), (1,)), ((), ())),
        preferred_element_type=jnp.float32,
    )  # (1, TB)
    o_ref[0] = score + b2_ref[0]


def prepare_ranking_params(w1, b1, w2, b2, query_dim):
    """One-time parameter prep (hoisted out of the per-call path).

    w1: (Dq+Dd, H) = fc1.weight.T, b1: (H,), w2: (H, 1) = fc2.weight.T, b2: (1,)
    """
    D, H = w1.shape
    assert w2.shape == (H, 1)
    w1q = jnp.asarray(w1[:query_dim, :], jnp.float32)   # (Dq, H)
    w1d = jnp.asarray(w1[query_dim:, :], jnp.float32)   # (Dd, H)
    b1_row = jnp.asarray(b1, jnp.float32).reshape(1, H)
    w2_row = jnp.asarray(w2, jnp.float32).reshape(1, H)  # column -> lane row vector
    b2_s = jnp.asarray(b2, jnp.float32).reshape(1)       # SMEM scalar
    return w1q, w1d, b1_row, w2_row, b2_s


def ranking_model_forward(query_emb, doc_emb, params, *, block_b=8192):
    """Pallas implementation of RankingModel.forward.

    query_emb: (B, Dq) f32, doc_emb: (B, Dd) f32
    params:    output of prepare_ranking_params
    returns:   (B, 1) f32
    """
    w1q, w1d, b1_row, w2_row, b2_s = params
    B, Dq = query_emb.shape
    Bd, Dd = doc_emb.shape
    assert B == Bd
    assert w1q.shape[0] == Dq and w1d.shape[0] == Dd
    H = w1q.shape[1]
    D = Dq + Dd

    # Feed f32 activations straight in (no wrapper-side cast pass).
    q = jnp.asarray(query_emb, jnp.float32)
    d = jnp.asarray(doc_emb, jnp.float32)

    # Batch tile: large (default 8K rows) to amortize the ~0.35us per-step
    # overhead, but for B > 16 capped so the grid has >= 2 steps so both v7x
    # TensorCores get work.  Padded-VMEM check (f32, lane-padded to 128):
    # q + d double buffers ~= 4 * TB * 128 * 4 B  -> 16 MiB at TB=8192,
    # plus the (TB, 128) f32 hidden temp (~4 MiB) -> well under v7x's 64 MiB.
    tb = min(block_b, _round_up(B, 8))
    if B > 16 and pl.cdiv(B, tb) < 2:
        tb = _round_up(pl.cdiv(B, 2), 8)
    n_tiles = pl.cdiv(B, tb)

    cost = pl.CostEstimate(
        flops=2 * B * D * H + 4 * B * H,
        transcendentals=0,
        bytes_accessed=(B * D * 4          # streamed f32 activations
                        + D * H * 4        # fc1 weights
                        + 2 * H * 4 + 4    # b1, w2 row, b2
                        + B * 4),          # scores
    )

    out = pl.pallas_call(
        _ranking_mlp_kernel,
        out_shape=jax.ShapeDtypeStruct((n_tiles, 1, tb), jnp.float32),
        grid=(n_tiles,),
        in_specs=[
            pl.BlockSpec((tb, Dq), lambda i: (i, 0)),            # query tile (streamed)
            pl.BlockSpec((tb, Dd), lambda i: (i, 0)),            # doc tile   (streamed)
            pl.BlockSpec((Dq, H), lambda i: (0, 0)),             # W1q (resident)
            pl.BlockSpec((Dd, H), lambda i: (0, 0)),             # W1d (resident)
            pl.BlockSpec((1, H), lambda i: (0, 0)),              # b1  (resident)
            pl.BlockSpec((1, H), lambda i: (0, 0)),              # w2 row (resident)
            pl.BlockSpec(memory_space=pltpu.MemorySpace.SMEM),   # b2 scalar
        ],
        out_specs=pl.BlockSpec((1, 1, tb), lambda i: (i, 0, 0)),  # lane-dense scores
        compiler_params=pltpu.CompilerParams(
            dimension_semantics=("parallel",),
            vmem_limit_bytes=64 << 20,
        ),
        cost_estimate=cost,
    )(q, d, w1q, w1d, b1_row, w2_row, b2_s)

    # (n_tiles, 1, tb) lane-dense tiles -> (B, 1); padded rows (when B % tb != 0)
    # are sliced off here.
    return out.reshape(n_tiles * tb)[:B].reshape(B, 1)


def init_params(key, input_dim, hidden=128):
    """Deterministic init matching nn.Linear's U(-1/sqrt(fan_in), 1/sqrt(fan_in))."""
    k1, k2, k3, k4 = jax.random.split(key, 4)
    bound1 = 1.0 / jnp.sqrt(jnp.float32(input_dim))
    bound2 = 1.0 / jnp.sqrt(jnp.float32(hidden))
    w1 = jax.random.uniform(k1, (input_dim, hidden), jnp.float32, -bound1, bound1)
    b1 = jax.random.uniform(k2, (hidden,), jnp.float32, -bound1, bound1)
    w2 = jax.random.uniform(k3, (hidden, 1), jnp.float32, -bound2, bound2)
    b2 = jax.random.uniform(k4, (1,), jnp.float32, -bound2, bound2)
    return w1, b1, w2, b2


def reference_forward(query_emb, doc_emb, w1, b1, w2, b2):
    """Pure f32 JAX reference matching the PyTorch module."""
    combined = jnp.concatenate([query_emb, doc_emb], axis=1)
    h = jnp.maximum(
        jnp.dot(combined, w1, precision=jax.lax.Precision.HIGHEST) + b1, 0.0)
    return jnp.dot(h, w2, precision=jax.lax.Precision.HIGHEST) + b2


if __name__ == "__main__":
    # Small shapes consistent with the module: batch=8, query dim=16, doc dim=16.
    B, Dq, Dd, H = 8, 16, 16, 128
    input_dim = Dq + Dd

    key = jax.random.PRNGKey(0)
    kq, kd, kp = jax.random.split(key, 3)
    query_emb = jax.random.normal(kq, (B, Dq), jnp.float32)
    doc_emb = jax.random.normal(kd, (B, Dd), jnp.float32)
    w1, b1, w2, b2 = init_params(kp, input_dim, H)

    params = prepare_ranking_params(w1, b1, w2, b2, Dq)  # one-time weight prep
    out = ranking_model_forward(query_emb, doc_emb, params)
    out = jax.block_until_ready(out)

    ref = reference_forward(query_emb, doc_emb, w1, b1, w2, b2)
    assert out.shape == (B, 1)
    # f32 streaming inputs + f32 accumulation -> tight agreement with reference.
    assert jnp.allclose(out, ref, atol=1e-2, rtol=1e-2), "mismatch vs JAX reference"

    print("KERNEL_OK")
</pallas_src>

<mosaic_0001>
module attributes {stable_mosaic.version = 11 : i64} {
  func.func @_ranking_mlp_kernel(%arg0: i32, %arg1: memref<8x16xf32, #tpu.memory_space<vmem>>, %arg2: memref<8x16xf32, #tpu.memory_space<vmem>>, %arg3: memref<16x128xf32, #tpu.memory_space<vmem>>, %arg4: memref<16x128xf32, #tpu.memory_space<vmem>>, %arg5: memref<1x128xf32, #tpu.memory_space<vmem>>, %arg6: memref<1x128xf32, #tpu.memory_space<vmem>>, %arg7: memref<1xf32, #tpu.memory_space<smem>>, %arg8: memref<1x1x8xf32, #tpu.memory_space<vmem>>) attributes {dimension_semantics = [#tpu.dimension_semantics<parallel>], iteration_bounds = array<i64: 1>, scalar_prefetch = 0 : i64, scratch_operands = 0 : i64, tpu.core_type = #tpu.core_type<tc>, window_params = [{transform_indices = @transform_0, window_bounds = array<i64: 8, 16>}, {transform_indices = @transform_1, window_bounds = array<i64: 8, 16>}, {pipeline_mode = #tpu.pipeline_mode<synchronous>, transform_indices = @transform_2, window_bounds = array<i64: 16, 128>}, {pipeline_mode = #tpu.pipeline_mode<synchronous>, transform_indices = @transform_3, window_bounds = array<i64: 16, 128>}, {pipeline_mode = #tpu.pipeline_mode<synchronous>, transform_indices = @transform_4, window_bounds = array<i64: 1, 128>}, {pipeline_mode = #tpu.pipeline_mode<synchronous>, transform_indices = @transform_5, window_bounds = array<i64: 1, 128>}, {transform_indices = @transform_6, window_bounds = array<i64: 1>}, {transform_indices = @transform_7, window_bounds = array<i64: 1, 1, 8>}]} {
    %c0 = arith.constant 0 : index
    %c0_0 = arith.constant 0 : index
    %0 = vector.load %arg1[%c0, %c0_0] : memref<8x16xf32, #tpu.memory_space<vmem>>, vector<8x16xf32>
    %c0_1 = arith.constant 0 : index
    %c0_2 = arith.constant 0 : index
    %1 = vector.load %arg3[%c0_1, %c0_2] : memref<16x128xf32, #tpu.memory_space<vmem>>, vector<16x128xf32>
    %cst = arith.constant dense<0.000000e+00> : vector<8x128xf32>
    %2 = tpu.matmul %0, %1, %cst {dimension_numbers = #tpu.dot_dimension_numbers<[1], [0], [0], [1], [0, 0, 1, 1], [], []>} : vector<8x16xf32>, vector<16x128xf32>, vector<8x128xf32> -> vector<8x128xf32>
    %c0_3 = arith.constant 0 : index
    %c0_4 = arith.constant 0 : index
    %3 = vector.load %arg2[%c0_3, %c0_4] : memref<8x16xf32, #tpu.memory_space<vmem>>, vector<8x16xf32>
    %c0_5 = arith.constant 0 : index
    %c0_6 = arith.constant 0 : index
    %4 = vector.load %arg4[%c0_5, %c0_6] : memref<16x128xf32, #tpu.memory_space<vmem>>, vector<16x128xf32>
    %cst_7 = arith.constant dense<0.000000e+00> : vector<8x128xf32>
    %5 = tpu.matmul %3, %4, %cst_7 {dimension_numbers = #tpu.dot_dimension_numbers<[1], [0], [0], [1], [0, 0, 1, 1], [], []>} : vector<8x16xf32>, vector<16x128xf32>, vector<8x128xf32> -> vector<8x128xf32>
    %6 = arith.addf %2, %5 : vector<8x128xf32>
    %c0_8 = arith.constant 0 : index
    %c0_9 = arith.constant 0 : index
    %7 = vector.load %arg5[%c0_8, %c0_9] : memref<1x128xf32, #tpu.memory_space<vmem>>, vector<1x128xf32>
    %8 = vector.broadcast %7 : vector<1x128xf32> to vector<8x128xf32>
    %9 = arith.addf %6, %8 : vector<8x128xf32>
    %cst_10 = arith.constant 0.000000e+00 : f32
    %10 = vector.broadcast %cst_10 : f32 to vector<8x128xf32>
    %11 = arith.maximumf %9, %10 : vector<8x128xf32>
    %c0_11 = arith.constant 0 : index
    %c0_12 = arith.constant 0 : index
    %12 = vector.load %arg6[%c0_11, %c0_12] : memref<1x128xf32, #tpu.memory_space<vmem>>, vector<1x128xf32>
    %cst_13 = arith.constant dense<0.000000e+00> : vector<1x8xf32>
    %13 = tpu.matmul %12, %11, %cst_13 {dimension_numbers = #tpu.dot_dimension_numbers<[1], [1], [0], [0], [0, 0, 1, 0], [], []>} : vector<1x128xf32>, vector<8x128xf32>, vector<1x8xf32> -> vector<1x8xf32>
    %c0_14 = arith.constant 0 : index
    %14 = memref.load %arg7[%c0_14] : memref<1xf32, #tpu.memory_space<smem>>
    %15 = vector.broadcast %14 : f32 to vector<1x8xf32>
    %16 = arith.addf %13, %15 : vector<1x8xf32>
    %c0_15 = arith.constant 0 : index
    %c0_16 = arith.constant 0 : index
    %c0_17 = arith.constant 0 : index
    %17 = vector.load %arg8[%c0_15, %c0_16, %c0_17] : memref<1x1x8xf32, #tpu.memory_space<vmem>>, vector<1x1x8xf32>
    %18 = vector.shape_cast %17 : vector<1x1x8xf32> to vector<1x8xf32>
    %19 = vector.shape_cast %16 : vector<1x8xf32> to vector<1x1x8xf32>
    tpu.vector_store %arg8[%c0_15, %c0_16, %c0_17], %19 {strides = array<i32>} : memref<1x1x8xf32, #tpu.memory_space<vmem>>, vector<1x1x8xf32>,
    return
  }
  func.func @transform_0(%arg0: i32) -> (i32, i32) {
    %c0_i32 = arith.constant 0 : i32
    %c0_i32_0 = arith.constant 0 : i32
    return %arg0, %c0_i32 : i32, i32
  }
  func.func @transform_1(%arg0: i32) -> (i32, i32) {
    %c0_i32 = arith.constant 0 : i32
    %c0_i32_0 = arith.constant 0 : i32
    return %arg0, %c0_i32 : i32, i32
  }
  func.func @transform_2(%arg0: i32) -> (i32, i32) {
    %c0_i32 = arith.constant 0 : i32
    %c0_i32_0 = arith.constant 0 : i32
    %c0_i32_1 = arith.constant 0 : i32
    return %c0_i32, %c0_i32_0 : i32, i32
  }
  func.func @transform_3(%arg0: i32) -> (i32, i32) {
    %c0_i32 = arith.constant 0 : i32
    %c0_i32_0 = arith.constant 0 : i32
    %c0_i32_1 = arith.constant 0 : i32
    return %c0_i32, %c0_i32_0 : i32, i32
  }
  func.func @transform_4(%arg0: i32) -> (i32, i32) {
    %c0_i32 = arith.constant 0 : i32
    %c0_i32_0 = arith.constant 0 : i32
    %c0_i32_1 = arith.constant 0 : i32
    return %c0_i32, %c0_i32_0 : i32, i32
  }
  func.func @transform_5(%arg0: i32) -> (i32, i32) {
    %c0_i32 = arith.constant 0 : i32
    %c0_i32_0 = arith.constant 0 : i32
    %c0_i32_1 = arith.constant 0 : i32
    return %c0_i32, %c0_i32_0 : i32, i32
  }
  func.func @transform_6(%arg0: i32) -> i32 {
    %c0_i32 = arith.constant 0 : i32
    %c0_i32_0 = arith.constant 0 : i32
    return %c0_i32 : i32
  }
  func.func @transform_7(%arg0: i32) -> (i32, i32, i32) {
    %c0_i32 = arith.constant 0 : i32
    %c0_i32_0 = arith.constant 0 : i32
    %c0_i32_1 = arith.constant 0 : i32
    return %arg0, %c0_i32, %c0_i32_0 : i32, i32, i32
  }
}

</mosaic_0001>

<llo_original>
// kernel: tpu_custom_call.1
$region0: #{tpu_custom_call.1}
  #allocation0 [shape = 'u32[]', space=smem, size = 0x4, offset = 0x4, fixed_abs, tag = 'smem constant byte address 0x4 - core index']
  #allocation1 [shape = 'u32[144,128]{1,0:T(1,128)}', space=vmem, size = 0x12000, scoped, tag = 'internal scratch']
  #allocation2 [shape = 'f32[1]{0:T(128)S(6)}', space=smem, size = 0x200, scoped, tag = 'scoped memory for tpu_custom_call.1']
  %s0 = inlined_call_operand.hbm [shape: f32[8,16], index: 0, kind: input, shape index: {}]
  %s1 = inlined_call_operand.hbm [shape: f32[8,16], index: 1, kind: input, shape index: {}]
  %s2 = inlined_call_operand.hbm [shape: f32[16,128], index: 2, kind: input, shape index: {}]
  %s3 = inlined_call_operand.hbm [shape: f32[16,128], index: 3, kind: input, shape index: {}]
  %s4 = inlined_call_operand.hbm [shape: f32[1,128], index: 4, kind: input, shape index: {}]
  %s5 = inlined_call_operand.hbm [shape: f32[1,128], index: 5, kind: input, shape index: {}]
  %s6 = inlined_call_operand.<no memory space> [shape: f32[1], index: 6, kind: input, shape index: {}]
  %s7 = inlined_call_operand.hbm [shape: f32[1,1,8], index: 7, kind: output, shape index: {}]
  %s8 = sld [smem:[#allocation0]]
  $region62: #{tpu_custom_call.1} parent=0
    _
  %s10 = ssub.s32 1, %s8
  %s11 = scalar_select 0, %s10, %s8
  %12 = sst [smem:[#allocation2]] %s6
  $region1: #{tpu_custom_call.1} parent=0
    #allocation3 [shape = 'u8[4096]{0}', space=vmem, size = 0x1000, scoped, tag = 'input window, operand 0, single buffered']
    #allocation4 [shape = 's32[1]{0}', space=sflag, size = 0x4, scoped, tag = 'scoped memory for tpu_custom_call.1']
    #allocation5 [shape = 's32[1]{0}', space=sflag, size = 0x4, scoped, tag = 'scoped memory for tpu_custom_call.1']
    #allocation6 [shape = 'u8[4096]{0}', space=vmem, size = 0x1000, scoped, tag = 'input window, operand 1, single buffered']
    #allocation7 [shape = 's32[1]{0}', space=sflag, size = 0x4, scoped, tag = 'scoped memory for tpu_custom_call.1']
    #allocation8 [shape = 'u8[8192]{0}', space=vmem, size = 0x2000, scoped, tag = 'input window, operand 2, single buffered']
    #allocation9 [shape = 'u8[8192]{0}', space=vmem, size = 0x2000, scoped, tag = 'input window, operand 3, single buffered']
    #allocation10 [shape = 's32[1]{0}', space=sflag, size = 0x4, scoped, tag = 'scoped memory for tpu_custom_call.1']
    #allocation11 [shape = 'u8[512]{0}', space=vmem, size = 0x400, scoped, tag = 'input window, operand 4, single buffered']
    #allocation12 [shape = 'u8[512]{0}', space=vmem, size = 0x400, scoped, tag = 'input window, operand 5, single buffered']
    #allocation13 [shape = 's32[1]{0}', space=sflag, size = 0x4, scoped, tag = 'scoped memory for tpu_custom_call.1']
    #allocation14 [shape = 'u8[512]{0}', space=vmem, size = 0x400, scoped, tag = 'output window, operand 0, single buffered']
    %13 = vsyncpa [#allocation4], 0
    %14 = vsyncpa [#allocation7], 0
    %15 = vsyncpa [#allocation10], 0
    %16 = vsyncpa [#allocation13], 0
    %17 = vsyncpa [#allocation5], 0
    // Predicated region
    $region2: #{tpu_custom_call.1} parent=1 // pred_check
      _
    $region3: #{tpu_custom_call.1} parent=1 // pred_check_branch
      %19 = sbr.rel (0) target = $region5
    $region4: #{tpu_custom_call.1} parent=1 // pred_region
      %s21 = ssub.s32 128, 128
      %22 = vsyncadd [#allocation4], %s21
      %s24 = sshll.u32 [#allocation3], 4
      %s25 = int_to_ptr.vmem [resolvable:$true] %s24
      %27 = dma.hbm_to_vmem [thread:$0]  %s0, 128, %s25, [#allocation4]
    $region5: #{tpu_custom_call.1} parent=1 // pred_fallthru
      _
    // Predicated region
    $region6: #{tpu_custom_call.1} parent=1 // pred_check
      _
    $region7: #{tpu_custom_call.1} parent=1 // pred_check_branch
      %29 = sbr.rel (0) target = $region9
    $region8: #{tpu_custom_call.1} parent=1 // pred_region
      %s31 = ssub.s32 128, 128
      %32 = vsyncadd [#allocation7], %s31
      %s34 = sshll.u32 [#allocation6], 4
      %s35 = int_to_ptr.vmem [resolvable:$true] %s34
      %37 = dma.hbm_to_vmem [thread:$0]  %s1, 128, %s35, [#allocation7]
    $region9: #{tpu_custom_call.1} parent=1 // pred_fallthru
      _
    // Predicated region
    $region10: #{tpu_custom_call.1} parent=1 // pred_check
      _
    $region11: #{tpu_custom_call.1} parent=1 // pred_check_branch
      %39 = sbr.rel (0) target = $region13
    $region12: #{tpu_custom_call.1} parent=1 // pred_region
      %s41 = ssub.s32 256, 256
      %42 = vsyncadd [#allocation7], %s41
      %s43 = sshll.u32 [#allocation8], 4
      %s44 = int_to_ptr.vmem [resolvable:$true] %s43
      %49 = dma.hbm_to_vmem [thread:$0]  %s2, 256, %s44, [#allocation7], 128, 128, 8
    $region13: #{tpu_custom_call.1} parent=1 // pred_fallthru
      _
    // Predicated region
    $region14: #{tpu_custom_call.1} parent=1 // pred_check
      _
    $region15: #{tpu_custom_call.1} parent=1 // pred_check_branch
      %51 = sbr.rel (0) target = $region17
    $region16: #{tpu_custom_call.1} parent=1 // pred_region
      %s53 = ssub.s32 256, 256
      %54 = vsyncadd [#allocation10], %s53
      %s55 = sshll.u32 [#allocation9], 4
      %s56 = int_to_ptr.vmem [resolvable:$true] %s55
      %61 = dma.hbm_to_vmem [thread:$0]  %s3, 256, %s56, [#allocation10], 128, 128, 8
    $region17: #{tpu_custom_call.1} parent=1 // pred_fallthru
      _
    // Predicated region
    $region18: #{tpu_custom_call.1} parent=1 // pred_check
      _
    $region19: #{tpu_custom_call.1} parent=1 // pred_check_branch
      %63 = sbr.rel (0) target = $region21
    $region20: #{tpu_custom_call.1} parent=1 // pred_region
      %s65 = ssub.s32 16, 16
      %66 = vsyncadd [#allocation10], %s65
      %s68 = sshll.u32 [#allocation11], 4
      %s69 = int_to_ptr.vmem [resolvable:$true] %s68
      %71 = dma.hbm_to_vmem [thread:$0]  %s4, 16, %s69, [#allocation10]
    $region21: #{tpu_custom_call.1} parent=1 // pred_fallthru
      _
    // Predicated region
    $region22: #{tpu_custom_call.1} parent=1 // pred_check
      _
    $region23: #{tpu_custom_call.1} parent=1 // pred_check_branch
      %73 = sbr.rel (0) target = $region25
    $region24: #{tpu_custom_call.1} parent=1 // pred_region
      %s75 = ssub.s32 16, 16
      %76 = vsyncadd [#allocation13], %s75
      %s78 = sshll.u32 [#allocation12], 4
      %s79 = int_to_ptr.vmem [resolvable:$true] %s78
      %81 = dma.hbm_to_vmem [thread:$0]  %s5, 16, %s79, [#allocation13]
    $region25: #{tpu_custom_call.1} parent=1 // pred_fallthru
      _
    // Predicated region
    $region26: #{tpu_custom_call.1} parent=1 // pred_check
      _
    $region27: #{tpu_custom_call.1} parent=1 // pred_check_branch
      %83 = sbr.rel (0) target = $region29
    $region28: #{tpu_custom_call.1} parent=1 // pred_region
      _
    $region29: #{tpu_custom_call.1} parent=1 // pred_fallthru
      _
    // Predicated region
    $region30: #{tpu_custom_call.1} parent=1 // pred_check
      _
    $region31: #{tpu_custom_call.1} parent=1 // pred_check_branch
      %85 = sbr.rel (0) target = $region33
    $region32: #{tpu_custom_call.1} parent=1 // pred_region
      %86 = dma.done [#allocation4], 128
    $region33: #{tpu_custom_call.1} parent=1 // pred_fallthru
      _
    // Predicated region
    $region34: #{tpu_custom_call.1} parent=1 // pred_check
      _
    $region35: #{tpu_custom_call.1} parent=1 // pred_check_branch
      %88 = sbr.rel (0) target = $region37
    $region36: #{tpu_custom_call.1} parent=1 // pred_region
      %89 = dma.done [#allocation7], 128
    $region37: #{tpu_custom_call.1} parent=1 // pred_fallthru
      _
    // Predicated region
    $region38: #{tpu_custom_call.1} parent=1 // pred_check
      _
    $region39: #{tpu_custom_call.1} parent=1 // pred_check_branch
      %91 = sbr.rel (0) target = $region41
    $region40: #{tpu_custom_call.1} parent=1 // pred_region
      %92 = dma.done [#allocation7], 256
    $region41: #{tpu_custom_call.1} parent=1 // pred_fallthru
      _
    // Predicated region
    $region42: #{tpu_custom_call.1} parent=1 // pred_check
      _
    $region43: #{tpu_custom_call.1} parent=1 // pred_check_branch
      %94 = sbr.rel (0) target = $region45
    $region44: #{tpu_custom_call.1} parent=1 // pred_region
      %95 = dma.done [#allocation10], 256
    $region45: #{tpu_custom_call.1} parent=1 // pred_fallthru
      _
    // Predicated region
    $region46: #{tpu_custom_call.1} parent=1 // pred_check
      _
    $region47: #{tpu_custom_call.1} parent=1 // pred_check_branch
      %97 = sbr.rel (0) target = $region49
    $region48: #{tpu_custom_call.1} parent=1 // pred_region
      %98 = dma.done [#allocation10], 16
    $region49: #{tpu_custom_call.1} parent=1 // pred_fallthru
      _
    // Predicated region
    $region50: #{tpu_custom_call.1} parent=1 // pred_check
      _
    $region51: #{tpu_custom_call.1} parent=1 // pred_check_branch
      %100 = sbr.rel (0) target = $region53
    $region52: #{tpu_custom_call.1} parent=1 // pred_region
      %101 = dma.done [#allocation13], 16
    $region53: #{tpu_custom_call.1} parent=1 // pred_fallthru
      _
    %v102 = vld [vmem:[#allocation3] sm:$0xff]
    %v103 = vld [vmem:[#allocation8] sm:$0xff]
    %v104 = vld [vmem:[#allocation8 + $0x8] sm:$0xff]
    %v105 = vld [vmem:[#allocation6] sm:$0xff]
    %v106 = vld [vmem:[#allocation9] sm:$0xff]
    %v107 = vld [vmem:[#allocation9 + $0x8] sm:$0xff]
    %vm108 = vcmask 130048
    %v110 = vsel %vm108, %v105, 0
    %112 = vmatprep.subr.mxu0 0.0
    %113 = vmatpush1.msra.mxu0 %v106
    %114 = vmatprep.subr.mxu0 0.0
    %115 = vmatpush1.msra.mxu0 %v107
    %116 = vmatprep.subr.mxu0 0.0
    %117 = vmatpush1.msra.mxu0 0.0
    %118 = vmatprep.subr.mxu0 0.0
    %119 = vmatpush1.msra.mxu0 0.0
    %120 = vmatprep.subr.mxu0 0.0
    %121 = vmatpush1.msra.mxu0 0.0
    %122 = vmatprep.subr.mxu0 0.0
    %123 = vmatpush1.msra.mxu0 0.0
    %124 = vmatprep.subr.mxu0 0.0
    %125 = vmatpush1.msra.mxu0 0.0
    %126 = vmatprep.subr.mxu0 0.0
    %127 = vmatpush1.msra.mxu0 0.0
    %128 = vmatprep.subr.mxu0 0.0
    %129 = vmatpush1.msra.mxu0 0.0
    %130 = vmatprep.subr.mxu0 0.0
    %131 = vmatpush1.msra.mxu0 0.0
    %132 = vmatprep.subr.mxu0 0.0
    %133 = vmatpush1.msra.mxu0 0.0
    %134 = vmatprep.subr.mxu0 0.0
    %135 = vmatpush1.msra.mxu0 0.0
    %136 = vmatprep.subr.mxu0 0.0
    %137 = vmatpush1.msra.mxu0 0.0
    %138 = vmatprep.subr.mxu0 0.0
    %139 = vmatpush1.msra.mxu0 0.0
    %140 = vmatprep.subr.mxu0 0.0
    %141 = vmatpush1.msra.mxu0 0.0
    %142 = vmatprep.subr.mxu0 0.0
    %143 = vmatpush1.msra.mxu0 0.0
    %144 = vmatprep.subr.mxu0 0.0
    %145 = vmatpush1.msra.mxu0 0.0
    %146 = vmatprep.subr.mxu0 0.0
    %147 = vmatpush1.msra.mxu0 0.0
    %148 = vmatprep.subr.mxu0 0.0
    %149 = vmatpush1.msra.mxu0 0.0
    %150 = vmatprep.subr.mxu0 0.0
    %151 = vmatpush1.msra.mxu0 0.0
    %152 = vmatprep.subr.mxu0 0.0
    %153 = vmatpush1.msra.mxu0 0.0
    %154 = vmatprep.subr.mxu0 0.0
    %155 = vmatpush1.msra.mxu0 0.0
    %156 = vmatprep.subr.mxu0 0.0
    %157 = vmatpush1.msra.mxu0 0.0
    %158 = vmatprep.subr.mxu0 0.0
    %159 = vmatpush1.msra.mxu0 0.0
    %160 = vmatprep.subr.mxu0 0.0
    %161 = vmatpush1.msra.mxu0 0.0
    %162 = vmatprep.subr.mxu0 0.0
    %163 = vmatpush1.msra.mxu0 0.0
    %164 = vmatprep.subr.mxu0 0.0
    %165 = vmatpush1.msra.mxu0 0.0
    %166 = vmatprep.subr.mxu0 0.0
    %167 = vmatpush1.msra.mxu0 0.0
    %168 = vmatprep.subr.mxu0 0.0
    %169 = vmatpush1.msra.mxu0 0.0
    %170 = vmatprep.subr.mxu0 0.0
    %171 = vmatpush1.msra.mxu0 0.0
    %172 = vmatprep.subr.mxu0 0.0
    %173 = vmatpush1.msra.mxu0 0.0
    %174 = vmatprep.subr.mxu0 0.0
    %175 = vmatpush1.msra.mxu0 0.0
    %176 = vmatprep.mubr.f32.mxu0 0.0
    %177 = vmatmul.mubr.f32.gmra.mrb[0].mxu0 %v110
    %v178 = vpop.f32.mrb[0].mxu0
    %v179 = vadd.f32 0.0, %v178
    %v180 = vpop.f32.mrb[0].mxu0
    %181 = vdwg.mxu0
    %v183 = vsel %vm108, %v102, 0
    %185 = vmatprep.subr.mxu0 0.0
    %186 = vmatpush1.msra.mxu0 %v103
    %187 = vmatprep.subr.mxu0 0.0
    %188 = vmatpush1.msra.mxu0 %v104
    %189 = vmatprep.subr.mxu0 0.0
    %190 = vmatpush1.msra.mxu0 0.0
    %191 = vmatprep.subr.mxu0 0.0
    %192 = vmatpush1.msra.mxu0 0.0
    %193 = vmatprep.subr.mxu0 0.0
    %194 = vmatpush1.msra.mxu0 0.0
    %195 = vmatprep.subr.mxu0 0.0
    %196 = vmatpush1.msra.mxu0 0.0
    %197 = vmatprep.subr.mxu0 0.0
    %198 = vmatpush1.msra.mxu0 0.0
    %199 = vmatprep.subr.mxu0 0.0
    %200 = vmatpush1.msra.mxu0 0.0
    %201 = vmatprep.subr.mxu0 0.0
    %202 = vmatpush1.msra.mxu0 0.0
    %203 = vmatprep.subr.mxu0 0.0
    %204 = vmatpush1.msra.mxu0 0.0
    %205 = vmatprep.subr.mxu0 0.0
    %206 = vmatpush1.msra.mxu0 0.0
    %207 = vmatprep.subr.mxu0 0.0
    %208 = vmatpush1.msra.mxu0 0.0
    %209 = vmatprep.subr.mxu0 0.0
    %210 = vmatpush1.msra.mxu0 0.0
    %211 = vmatprep.subr.mxu0 0.0
    %212 = vmatpush1.msra.mxu0 0.0
    %213 = vmatprep.subr.mxu0 0.0
    %214 = vmatpush1.msra.mxu0 0.0
    %215 = vmatprep.subr.mxu0 0.0
    %216 = vmatpush1.msra.mxu0 0.0
    %217 = vmatprep.subr.mxu0 0.0
    %218 = vmatpush1.msra.mxu0 0.0
    %219 = vmatprep.subr.mxu0 0.0
    %220 = vmatpush1.msra.mxu0 0.0
    %221 = vmatprep.subr.mxu0 0.0
    %222 = vmatpush1.msra.mxu0 0.0
    %223 = vmatprep.subr.mxu0 0.0
    %224 = vmatpush1.msra.mxu0 0.0
    %225 = vmatprep.subr.mxu0 0.0
    %226 = vmatpush1.msra.mxu0 0.0
    %227 = vmatprep.subr.mxu0 0.0
    %228 = vmatpush1.msra.mxu0 0.0
    %229 = vmatprep.subr.mxu0 0.0
    %230 = vmatpush1.msra.mxu0 0.0
    %231 = vmatprep.subr.mxu0 0.0
    %232 = vmatpush1.msra.mxu0 0.0
    %233 = vmatprep.subr.mxu0 0.0
    %234 = vmatpush1.msra.mxu0 0.0
    %235 = vmatprep.subr.mxu0 0.0
    %236 = vmatpush1.msra.mxu0 0.0
    %237 = vmatprep.subr.mxu0 0.0
    %238 = vmatpush1.msra.mxu0 0.0
    %239 = vmatprep.subr.mxu0 0.0
    %240 = vmatpush1.msra.mxu0 0.0
    %241 = vmatprep.subr.mxu0 0.0
    %242 = vmatpush1.msra.mxu0 0.0
    %243 = vmatprep.subr.mxu0 0.0
    %244 = vmatpush1.msra.mxu0 0.0
    %245 = vmatprep.subr.mxu0 0.0
    %246 = vmatpush1.msra.mxu0 0.0
    %247 = vmatprep.subr.mxu0 0.0
    %248 = vmatpush1.msra.mxu0 0.0
    %249 = vmatprep.mubr.f32.mxu0 0.0
    %250 = vmatmul.mubr.f32.gmra.mrb[0].mxu0 %v183
    %v251 = vpop.f32.mrb[0].mxu0
    %v252 = vadd.f32 %v179, %v251
    %v253 = vpop.f32.mrb[0].mxu0
    %254 = vdwg.mxu0
    %v255 = vld [vmem:[#allocation11] sm:$0x1]
    %v257 = vlaneseq
    %v258 = vshrl.u32 %v257, 7
    %v259 = vsub.s32 0, %v258
    %v260 = vrot.slane %v255, %v259
    %v262 = vadd.f32 %v252, %v260
    %v263 = vmax.f32 %v262, 0.0
    %v264 = vld [vmem:[#allocation12] sm:$0x1]
    %s265 = sld [smem:[#allocation2]]
    %v266 = vstv %s265
    %267 = vmatprep.subr.mxu0 0.0
    %268 = vmatpush1.xpose.msra.mxu0 %v263
    %269 = vmatprep.subr.mxu0 0.0
    %270 = vmatpush1.xpose.msra.mxu0 0.0
    %271 = vmatprep.subr.mxu0 0.0
    %272 = vmatpush1.xpose.msra.mxu0 0.0
    %273 = vmatprep.subr.mxu0 0.0
    %274 = vmatpush1.xpose.msra.mxu0 0.0
    %275 = vmatprep.subr.mxu0 0.0
    %276 = vmatpush1.xpose.msra.mxu0 0.0
    %277 = vmatprep.subr.mxu0 0.0
    %278 = vmatpush1.xpose.msra.mxu0 0.0
    %279 = vmatprep.subr.mxu0 0.0
    %280 = vmatpush1.xpose.msra.mxu0 0.0
    %281 = vmatprep.subr.mxu0 0.0
    %282 = vmatpush1.xpose.msra.mxu0 0.0
    %283 = vmatprep.subr.mxu0 0.0
    %284 = vmatpush1.xpose.msra.mxu0 0.0
    %285 = vmatprep.subr.mxu0 0.0
    %286 = vmatpush1.xpose.msra.mxu0 0.0
    %287 = vmatprep.subr.mxu0 0.0
    %288 = vmatpush1.xpose.msra.mxu0 0.0
    %289 = vmatprep.subr.mxu0 0.0
    %290 = vmatpush1.xpose.msra.mxu0 0.0
    %291 = vmatprep.subr.mxu0 0.0
    %292 = vmatpush1.xpose.msra.mxu0 0.0
    %293 = vmatprep.subr.mxu0 0.0
    %294 = vmatpush1.xpose.msra.mxu0 0.0
    %295 = vmatprep.subr.mxu0 0.0
    %296 = vmatpush1.xpose.msra.mxu0 0.0
    %297 = vmatprep.subr.mxu0 0.0
    %298 = vmatpush1.xpose.msra.mxu0 0.0
    %299 = vmatprep.subr.mxu0 0.0
    %300 = vmatpush1.xpose.msra.mxu0 0.0
    %301 = vmatprep.subr.mxu0 0.0
    %302 = vmatpush1.xpose.msra.mxu0 0.0
    %303 = vmatprep.subr.mxu0 0.0
    %304 = vmatpush1.xpose.msra.mxu0 0.0
    %305 = vmatprep.subr.mxu0 0.0
    %306 = vmatpush1.xpose.msra.mxu0 0.0
    %307 = vmatprep.subr.mxu0 0.0
    %308 = vmatpush1.xpose.msra.mxu0 0.0
    %309 = vmatprep.subr.mxu0 0.0
    %310 = vmatpush1.xpose.msra.mxu0 0.0
    %311 = vmatprep.subr.mxu0 0.0
    %312 = vmatpush1.xpose.msra.mxu0 0.0
    %313 = vmatprep.subr.mxu0 0.0
    %314 = vmatpush1.xpose.msra.mxu0 0.0
    %315 = vmatprep.subr.mxu0 0.0
    %316 = vmatpush1.xpose.msra.mxu0 0.0
    %317 = vmatprep.subr.mxu0 0.0
    %318 = vmatpush1.xpose.msra.mxu0 0.0
    %319 = vmatprep.subr.mxu0 0.0
    %320 = vmatpush1.xpose.msra.mxu0 0.0
    %321 = vmatprep.subr.mxu0 0.0
    %322 = vmatpush1.xpose.msra.mxu0 0.0
    %323 = vmatprep.subr.mxu0 0.0
    %324 = vmatpush1.xpose.msra.mxu0 0.0
    %325 = vmatprep.subr.mxu0 0.0
    %326 = vmatpush1.xpose.msra.mxu0 0.0
    %327 = vmatprep.subr.mxu0 0.0
    %328 = vmatpush1.xpose.msra.mxu0 0.0
    %329 = vmatprep.subr.mxu0 0.0
    %330 = vmatpush1.xpose.msra.mxu0 0.0
    %331 = vmatprep.mubr.f32.mxu0 0.0
    %332 = vmatmul.mubr.f32.gmra.mrb[0].mxu0 %v264
    %v333 = vpop.f32.mrb[0].mxu0
    %v334 = vadd.f32 %v266, %v333
    %v335 = vpop.f32.mrb[0].mxu0
    %336 = vdwg.mxu0
    %vm337 = vcmask 57344
    %338 = vst.msk [vmem:[#allocation14] sm:$0x1] %vm337, %v334
    // Predicated region
    $region54: #{tpu_custom_call.1} parent=1 // pred_check
      _
    $region55: #{tpu_custom_call.1} parent=1 // pred_check_branch
      %340 = sbr.rel (0) target = $region57
    $region56: #{tpu_custom_call.1} parent=1 // pred_region
      %s342 = ssub.s32 16, 16
      %343 = vsyncadd [#allocation5], %s342
      %s345 = sshll.u32 [#allocation14], 4
      %s346 = int_to_ptr.vmem [resolvable:$true] %s345
      %348 = dma.vmem_to_hbm [thread:$0]  %s346, 16, %s7, [#allocation5]
    $region57: #{tpu_custom_call.1} parent=1 // pred_fallthru
      _
    // Predicated region
    $region58: #{tpu_custom_call.1} parent=1 // pred_check
      _
    $region59: #{tpu_custom_call.1} parent=1 // pred_check_branch
      %350 = sbr.rel (0) target = $region61
    $region60: #{tpu_custom_call.1} parent=1 // pred_region
      %351 = dma.done [#allocation5], 16
    $region61: #{tpu_custom_call.1} parent=1 // pred_fallthru
      _
    %352 = vsyncpa [#allocation4], 1
    %353 = vsyncpa [#allocation7], 1
    %354 = vsyncpa [#allocation10], 1
    %355 = vsyncpa [#allocation13], 1
    %356 = vsyncpa [#allocation5], 1

</llo_original>
